<compile_context>
chip_gen: v5e
topology: v5e:2x2
jax: 0.10.0
libtpu: 0.0.40
codegen_flags: <defaults>
</compile_context>

<pallas_src>
import functools

import jax
import jax.numpy as jnp
from jax.experimental import pallas as pl
from jax.experimental.pallas import tpu as pltpu

_LANES = 128
_SUBLANES = 8


def _mpe_kernel(p_ref, t_ref, acc_ref, *, inner_steps, tile_rows, n_tiles,
                tail_rows, guard_tail, mask_last):
    i = pl.program_id(0)
    j = pl.program_id(1)

    @pl.when(j == 0)
    def _init():
        acc_ref[...] = jnp.zeros_like(acc_ref)

    t = t_ref[...].astype(jnp.float32)
    p = p_ref[...].astype(jnp.float32)
    # Reciprocal-multiply instead of divide: an f32 divide lowers to a
    # multi-op Newton sequence on the VALU; pl.reciprocal (approx=False keeps
    # full precision for the test tolerance) offloads to the EUP slot.
    x = jnp.abs((t - p) * pl.reciprocal(t, approx=False))

    def vreg_sum(v):
        # Pure-VPU partial reduction into a vreg-shaped (1, 8, 128)
        # accumulator; cross-lane/sublane reduce deferred to the JAX epilogue.
        return v.reshape(tile_rows // _SUBLANES, _SUBLANES, _LANES).sum(axis=0)[None]

    blk = i * inner_steps + j  # logical (unclamped) tile index

    if mask_last:
        # Last real tile extends past the data: mask invalid rows.  This
        # branch executes on exactly one grid step; full tiles are mask-free.
        @pl.when(blk == n_tiles - 1)
        def _tail():
            row = jax.lax.broadcasted_iota(jnp.int32, (tile_rows, _LANES), 0)
            acc_ref[...] += vreg_sum(jnp.where(row < tail_rows, x, 0.0))

        @pl.when(blk < n_tiles - 1)
        def _full():
            acc_ref[...] += vreg_sum(x)
    elif guard_tail:
        # Logical blocks past the end (clamped duplicates) are skipped with a
        # scalar guard instead of an element-wise mask.
        @pl.when(blk < n_tiles)
        def _full():
            acc_ref[...] += vreg_sum(x)
    else:
        acc_ref[...] += vreg_sum(x)


def mpe_regression_loss(y_pred, y_true, *, max_tile_rows=8192):
    """Pallas implementation of MPERegressionLoss.forward for arbitrary shapes."""
    assert y_pred.shape == y_true.shape
    n = y_pred.size
    chunk = _SUBLANES * _LANES                    # 1024

    p_flat = y_pred.reshape(-1)                   # native dtype, no copy
    t_flat = y_true.reshape(-1)
    padded = pl.cdiv(n, chunk) * chunk
    if padded != n:
        pad = padded - n
        # Invariant the kernel relies on: pad BOTH arrays with 1 so that
        # (t - p) * reciprocal(t) == 0 exactly for every padded entry.
        p_flat = jnp.pad(p_flat, (0, pad), constant_values=1)
        t_flat = jnp.pad(t_flat, (0, pad), constant_values=1)

    rows = padded // _LANES                       # multiple of 8
    max_tile_rows = max(_SUBLANES, (max_tile_rows // _SUBLANES) * _SUBLANES)
    tile_rows = min(max_tile_rows, rows)          # multiple of 8
    n_tiles = pl.cdiv(rows, tile_rows)
    num_slices = 2 if n_tiles >= 2 else 1         # feeds both v7x TensorCores
    inner_steps = pl.cdiv(n_tiles, num_slices)

    tail_rows = rows - (n_tiles - 1) * tile_rows  # valid rows in last tile
    mask_last = tail_rows != tile_rows            # last real tile is partial
    guard_tail = num_slices * inner_steps != n_tiles  # clamped duplicates exist

    p2 = p_flat.reshape(rows, _LANES)
    t2 = t_flat.reshape(rows, _LANES)

    if guard_tail:
        # Clamp logical blocks past the end onto the last real tile; their
        # contribution is skipped by the scalar pl.when guard in the kernel.
        idx_map = lambda i, j: (jnp.minimum(i * inner_steps + j, n_tiles - 1), 0)
    else:
        idx_map = lambda i, j: (i * inner_steps + j, 0)

    kernel = functools.partial(
        _mpe_kernel,
        inner_steps=inner_steps,
        tile_rows=tile_rows,
        n_tiles=n_tiles,
        tail_rows=tail_rows,
        guard_tail=guard_tail,
        mask_last=mask_last,
    )

    partials = pl.pallas_call(
        kernel,
        out_shape=jax.ShapeDtypeStruct((num_slices, _SUBLANES, _LANES),
                                       jnp.float32),
        grid_spec=pltpu.PrefetchScalarGridSpec(
            num_scalar_prefetch=0,
            grid=(num_slices, inner_steps),
            in_specs=[
                pl.BlockSpec((tile_rows, _LANES), idx_map),
                pl.BlockSpec((tile_rows, _LANES), idx_map),
            ],
            # Output block is the per-slice accumulator, resident across the
            # inner (reduction) axis.
            out_specs=pl.BlockSpec((1, _SUBLANES, _LANES),
                                   lambda i, j: (i, 0, 0)),
        ),
        compiler_params=pltpu.CompilerParams(
            # TODO(synk): on v7x, pltpu.CORE_PARALLEL on the leading axis may
            # shard more explicitly across the 2 TensorCores; "parallel" is the
            # portable choice.
            dimension_semantics=("parallel", "arbitrary"),
            # (8192,128) f32 tiles, two inputs, double-buffered = 16 MiB; raise
            # scoped VMEM so the same tile size also fits v5e's 16 MiB default.
            vmem_limit_bytes=32 * 1024 * 1024,
        ),
    )(p2, t2)

    # Tiny epilogue in plain JAX: sum of <= 2*8*128 partials, then mean scale.
    return partials.sum() / jnp.float32(n)


if __name__ == "__main__":
    key = jax.random.PRNGKey(0)

    def run_case(shape, case_key, **kw):
        k1, k2 = jax.random.split(case_key)
        y_true = jax.random.uniform(k1, shape, jnp.float32, minval=0.5, maxval=2.0)
        y_pred = y_true + 0.1 * jax.random.normal(k2, shape, jnp.float32)
        loss = jax.block_until_ready(mpe_regression_loss(y_pred, y_true, **kw))
        ref = jnp.mean(jnp.abs((y_true - y_pred) / y_true))
        assert jnp.allclose(loss, ref, rtol=2e-5, atol=1e-6), (shape, loss, ref)
        return loss

    keys = jax.random.split(key, 5)
    # primary: small NCHW regression target (aligned, single tile)
    run_case((2, 4, 16, 16), keys[0])
    # ragged element count (105): pad-with-1 path, no in-kernel mask
    run_case((3, 5, 7), keys[1])
    # large aligned input at the default tile size (single big 8192-row block)
    run_case((16, 64, 32, 32), keys[2])
    # multi-tile, even tile count: accumulation + 2-slice parallel axis
    run_case((16, 64, 32, 32), keys[3], max_tile_rows=2048)
    # odd tile count + partial last tile: clamped idx map + pl.when guard + row mask
    run_case((5, 64, 33, 32), keys[4], max_tile_rows=1024)

    print("KERNEL_OK")
</pallas_src>

<mosaic_0001>
module attributes {stable_mosaic.version = 11 : i64} {
  func.func @_mpe_kernel(%arg0: i32, %arg1: i32, %arg2: memref<16x128xf32, #tpu.memory_space<vmem>>, %arg3: memref<16x128xf32, #tpu.memory_space<vmem>>, %arg4: memref<1x8x128xf32, #tpu.memory_space<vmem>>) attributes {dimension_semantics = [#tpu.dimension_semantics<parallel>, #tpu.dimension_semantics<arbitrary>], iteration_bounds = array<i64: 1, 1>, scalar_prefetch = 0 : i64, scratch_operands = 0 : i64, tpu.core_type = #tpu.core_type<tc>, window_params = [{transform_indices = @transform_0, window_bounds = array<i64: 16, 128>}, {transform_indices = @transform_1, window_bounds = array<i64: 16, 128>}, {transform_indices = @transform_2, window_bounds = array<i64: 1, 8, 128>}]} {
    %c0_i32 = arith.constant 0 : i32
    %0 = arith.cmpi eq, %arg1, %c0_i32 : i32
    %1 = arith.extui %0 : i1 to i32
    %c0_i32_0 = arith.constant 0 : i32
    %2 = arith.cmpi ne, %1, %c0_i32_0 : i32
    scf.if %2 {
      %cst_10 = arith.constant 0.000000e+00 : f32
      %15 = vector.broadcast %cst_10 : f32 to vector<1x8x128xf32>
      %c0_11 = arith.constant 0 : index
      %c0_12 = arith.constant 0 : index
      %c0_13 = arith.constant 0 : index
      %16 = vector.load %arg4[%c0_11, %c0_12, %c0_13] : memref<1x8x128xf32, #tpu.memory_space<vmem>>, vector<1x8x128xf32>
      tpu.vector_store %arg4[%c0_11, %c0_12, %c0_13], %15 {strides = array<i32>} : memref<1x8x128xf32, #tpu.memory_space<vmem>>, vector<1x8x128xf32>,
    } else {
    }
    %c0 = arith.constant 0 : index
    %c0_1 = arith.constant 0 : index
    %3 = vector.load %arg3[%c0, %c0_1] : memref<16x128xf32, #tpu.memory_space<vmem>>, vector<16x128xf32>
    %c0_2 = arith.constant 0 : index
    %c0_3 = arith.constant 0 : index
    %4 = vector.load %arg2[%c0_2, %c0_3] : memref<16x128xf32, #tpu.memory_space<vmem>>, vector<16x128xf32>
    %5 = arith.subf %3, %4 : vector<16x128xf32>
    %6 = tpu.reciprocal %3 : vector<16x128xf32> -> vector<16x128xf32>
    %7 = arith.mulf %5, %6 : vector<16x128xf32>
    %8 = math.absf %7 : vector<16x128xf32>
    %c0_4 = arith.constant 0 : index
    %c0_5 = arith.constant 0 : index
    %c0_6 = arith.constant 0 : index
    %9 = vector.load %arg4[%c0_4, %c0_5, %c0_6] : memref<1x8x128xf32, #tpu.memory_space<vmem>>, vector<1x8x128xf32>
    %10 = vector.shape_cast %8 : vector<16x128xf32> to vector<2x8x128xf32>
    %cst = arith.constant dense<0.000000e+00> : vector<8x128xf32>
    %11 = vector.multi_reduction <add>, %10, %cst [0] : vector<2x8x128xf32> to vector<8x128xf32>
    %12 = vector.shape_cast %11 : vector<8x128xf32> to vector<1x8x128xf32>
    %13 = arith.addf %9, %12 : vector<1x8x128xf32>
    %c0_7 = arith.constant 0 : index
    %c0_8 = arith.constant 0 : index
    %c0_9 = arith.constant 0 : index
    %14 = vector.load %arg4[%c0_7, %c0_8, %c0_9] : memref<1x8x128xf32, #tpu.memory_space<vmem>>, vector<1x8x128xf32>
    tpu.vector_store %arg4[%c0_7, %c0_8, %c0_9], %13 {strides = array<i32>} : memref<1x8x128xf32, #tpu.memory_space<vmem>>, vector<1x8x128xf32>,
    return
  }
  func.func @transform_0(%arg0: i32, %arg1: i32) -> (i32, i32) {
    %c1_i32 = arith.constant 1 : i32
    %0 = arith.muli %arg0, %c1_i32 : i32
    %1 = arith.addi %0, %arg1 : i32
    %c0_i32 = arith.constant 0 : i32
    %c0_i32_0 = arith.constant 0 : i32
    return %1, %c0_i32 : i32, i32
  }
  func.func @transform_1(%arg0: i32, %arg1: i32) -> (i32, i32) {
    %c1_i32 = arith.constant 1 : i32
    %0 = arith.muli %arg0, %c1_i32 : i32
    %1 = arith.addi %0, %arg1 : i32
    %c0_i32 = arith.constant 0 : i32
    %c0_i32_0 = arith.constant 0 : i32
    return %1, %c0_i32 : i32, i32
  }
  func.func @transform_2(%arg0: i32, %arg1: i32) -> (i32, i32, i32) {
    %c0_i32 = arith.constant 0 : i32
    %c0_i32_0 = arith.constant 0 : i32
    %c0_i32_1 = arith.constant 0 : i32
    return %arg0, %c0_i32, %c0_i32_0 : i32, i32, i32
  }
}

</mosaic_0001>

<llo_original>
// kernel: tpu_custom_call.1
$region0: #{tpu_custom_call.1}
  #allocation0 [shape = 'u32[]', space=smem, size = 0x4, offset = 0x4, fixed_abs, tag = 'smem constant byte address 0x4 - core index']
  #allocation1 [shape = 'u32[72,128]{1,0:T(1,128)}', space=vmem, size = 0x9000, scoped, tag = 'internal scratch']
  %s0 = inlined_call_operand.hbm [shape: f32[16,128], index: 0, kind: input, shape index: {}]
  %s1 = inlined_call_operand.hbm [shape: f32[16,128], index: 1, kind: input, shape index: {}]
  %s2 = inlined_call_operand.hbm [shape: f32[1,8,128], index: 2, kind: output, shape index: {}]
  %s3 = sld [smem:[#allocation0]]
  $region30: #{tpu_custom_call.1} parent=0
    _
  %s5 = ssub.s32 1, %s3
  %s6 = scalar_select 0, %s5, %s3
  $region1: #{tpu_custom_call.1} parent=0
    #allocation2 [shape = 'u8[8192]{0}', space=vmem, size = 0x2000, scoped, tag = 'input window, operand 0, single buffered']
    #allocation3 [shape = 's32[1]{0}', space=sflag, size = 0x4, scoped, tag = 'scoped memory for tpu_custom_call.1']
    #allocation4 [shape = 's32[1]{0}', space=sflag, size = 0x4, scoped, tag = 'scoped memory for tpu_custom_call.1']
    #allocation5 [shape = 'u8[8192]{0}', space=vmem, size = 0x2000, scoped, tag = 'input window, operand 1, single buffered']
    #allocation6 [shape = 's32[1]{0}', space=sflag, size = 0x4, scoped, tag = 'scoped memory for tpu_custom_call.1']
    #allocation7 [shape = 'u8[4096]{0}', space=vmem, size = 0x1000, scoped, tag = 'output window, operand 0, single buffered']
    %7 = vsyncpa [#allocation3], 0
    %8 = vsyncpa [#allocation6], 0
    %9 = vsyncpa [#allocation4], 0
    // Predicated region
    $region2: #{tpu_custom_call.1} parent=1 // pred_check
      _
    $region3: #{tpu_custom_call.1} parent=1 // pred_check_branch
      %11 = sbr.rel (0) target = $region5
    $region4: #{tpu_custom_call.1} parent=1 // pred_region
      %s12 = sadd.s32 0, 0
      %s13 = smul.u32 2, %s12
      %15 = vsyncadd [#allocation3], 0
      %s16 = smul.addr %s13, 8
      %s17 = scalar_lea.hbm %s0, %s16
      %s18 = sshll.u32 %s17, 4
      %s19 = int_to_ptr.hbm [resolvable:$true] %s18
      %s20 = sshll.u32 [#allocation2], 4
      %s21 = int_to_ptr.vmem [resolvable:$true] %s20
      %26 = dma.hbm_to_vmem [thread:$0]  %s19, 256, %s21, [#allocation3], 128, 128, 8
    $region5: #{tpu_custom_call.1} parent=1 // pred_fallthru
      _
    // Predicated region
    $region6: #{tpu_custom_call.1} parent=1 // pred_check
      _
    $region7: #{tpu_custom_call.1} parent=1 // pred_check_branch
      %28 = sbr.rel (0) target = $region9
    $region8: #{tpu_custom_call.1} parent=1 // pred_region
      %s29 = sadd.s32 0, 0
      %s30 = smul.u32 2, %s29
      %32 = vsyncadd [#allocation6], 0
      %s33 = smul.addr %s30, 8
      %s34 = scalar_lea.hbm %s1, %s33
      %s35 = sshll.u32 %s34, 4
      %s36 = int_to_ptr.hbm [resolvable:$true] %s35
      %s37 = sshll.u32 [#allocation5], 4
      %s38 = int_to_ptr.vmem [resolvable:$true] %s37
      %43 = dma.hbm_to_vmem [thread:$0]  %s36, 256, %s38, [#allocation6], 128, 128, 8
    $region9: #{tpu_custom_call.1} parent=1 // pred_fallthru
      _
    // Predicated region
    $region10: #{tpu_custom_call.1} parent=1 // pred_check
      _
    $region11: #{tpu_custom_call.1} parent=1 // pred_check_branch
      %45 = sbr.rel (0) target = $region13
    $region12: #{tpu_custom_call.1} parent=1 // pred_region
      %47 = dma.done [#allocation3], 256
    $region13: #{tpu_custom_call.1} parent=1 // pred_fallthru
      _
    // Predicated region
    $region14: #{tpu_custom_call.1} parent=1 // pred_check
      _
    $region15: #{tpu_custom_call.1} parent=1 // pred_check_branch
      %49 = sbr.rel (0) target = $region17
    $region16: #{tpu_custom_call.1} parent=1 // pred_region
      %51 = dma.done [#allocation6], 256
    $region17: #{tpu_custom_call.1} parent=1 // pred_fallthru
      _
    %s52 = sadd.s32 0, 0
    %s53 = smul.u32 2, %s52
    %s54 = sadd.s32 0, 0
    %s55 = smul.u32 2, %s54
    %p56 = scmp.eq.s32.totalorder 0, 0
    // Predicated region
    $region18: #{tpu_custom_call.1} parent=1 // pred_check
      %p57 = pneg %p56
    $region19: #{tpu_custom_call.1} parent=1 // pred_check_branch
      %59 = sbr.rel (%p57) target = $region21
    $region20: #{tpu_custom_call.1} parent=1 // pred_region
      %60 = vst [vmem:[#allocation7] sm:$0xff] 0.0
    $region21: #{tpu_custom_call.1} parent=1 // pred_fallthru
      _
    %v61 = vld [vmem:[#allocation5] sm:$0xff]
    %v62 = vld [vmem:[#allocation5 + $0x8] sm:$0xff]
    %v63 = vld [vmem:[#allocation2] sm:$0xff]
    %v64 = vld [vmem:[#allocation2 + $0x8] sm:$0xff]
    %v65 = vsub.f32 %v61, %v63
    %v66 = vsub.f32 %v62, %v64
    %v67 = vrcp.pop %v61
    %v68 = vmul.f32 %v61, %v67
    %v69 = vsub.f32 1.0, %v68
    %v70 = vmul.f32 %v67, %v69
    %v71 = vadd.f32 %v67, %v70
    %vm72 = vweird.f32 %v61
    %vm73 = vweird.f32 %v67
    %vm74 = vmor %vm72, %vm73
    %v75 = vsel %vm74, %v67, %v71
    %v76 = vand.u32 2147483647, %v61
    %vm77 = vcmp.eq.f32.partialorder %v76, 8.507059e+37
    %v78 = vand.u32 %v61, 2147483648
    %v79 = vor.u32 1.1754944e-38, %v78
    %v80 = vsel %vm77, %v79, %v75
    %v81 = vrcp.pop %v62
    %v82 = vmul.f32 %v62, %v81
    %v83 = vsub.f32 1.0, %v82
    %v84 = vmul.f32 %v81, %v83
    %v85 = vadd.f32 %v81, %v84
    %vm86 = vweird.f32 %v62
    %vm87 = vweird.f32 %v81
    %vm88 = vmor %vm86, %vm87
    %v89 = vsel %vm88, %v81, %v85
    %v90 = vand.u32 2147483647, %v62
    %vm91 = vcmp.eq.f32.partialorder %v90, 8.507059e+37
    %v92 = vand.u32 %v62, 2147483648
    %v93 = vor.u32 1.1754944e-38, %v92
    %v94 = vsel %vm91, %v93, %v89
    %v95 = vmul.f32 %v65, %v80
    %v96 = vmul.f32 %v66, %v94
    %v97 = vand.u32 2147483647, %v95
    %v98 = vand.u32 2147483647, %v96
    %v99 = vld [vmem:[#allocation7] sm:$0xff]
    %v100 = vadd.f32 %v97, %v98
    %v101 = vadd.f32 %v99, %v100
    %102 = vst [vmem:[#allocation7] sm:$0xff] %v101
    // Predicated region
    $region22: #{tpu_custom_call.1} parent=1 // pred_check
      _
    $region23: #{tpu_custom_call.1} parent=1 // pred_check_branch
      %104 = sbr.rel (0) target = $region25
    $region24: #{tpu_custom_call.1} parent=1 // pred_region
      %106 = vsyncadd [#allocation4], 0
      %s108 = sshll.u32 [#allocation7], 4
      %s109 = int_to_ptr.vmem [resolvable:$true] %s108
      %s110 = sshll.u32 %s2, 4
      %s111 = int_to_ptr.hbm [resolvable:$true] %s110
      %113 = dma.vmem_to_hbm [thread:$0]  %s109, 128, %s111, [#allocation4]
    $region25: #{tpu_custom_call.1} parent=1 // pred_fallthru
      _
    // Predicated region
    $region26: #{tpu_custom_call.1} parent=1 // pred_check
      _
    $region27: #{tpu_custom_call.1} parent=1 // pred_check_branch
      %115 = sbr.rel (0) target = $region29
    $region28: #{tpu_custom_call.1} parent=1 // pred_region
      %117 = dma.done [#allocation4], 128
    $region29: #{tpu_custom_call.1} parent=1 // pred_fallthru
      _
    %118 = vsyncpa [#allocation3], 1
    %119 = vsyncpa [#allocation6], 1
    %120 = vsyncpa [#allocation4], 1

</llo_original>
